<compile_context>
chip_gen: v6e
topology: v6e:2x2x1
jax: 0.10.0
libtpu: 0.0.40
codegen_flags: <defaults>
</compile_context>

<pallas_src>
import math

import jax
import jax.numpy as jnp
from jax.experimental import pallas as pl
from jax.experimental.pallas import tpu as pltpu


TARGET_BLOCK_BYTES = 8 * 1024 * 1024   # per perf review (amortizes per-step overhead on v7x)
VMEM_LIMIT_BYTES = 40 * 1024 * 1024    # 2 (in+out) x 2 (double-buffer) x 8 MiB + slack


def _make_const_kernel(b, half_k, half_ka, compute_dtype):
    """Kernel with b, k/2, k*a/2 baked in as compile-time constants."""

    def kernel(x_ref, o_ref):
        x = x_ref[...].astype(compute_dtype)
        # sigmoid(k*(x-a)) == 0.5 * tanh(0.5*k*x - 0.5*k*a) + 0.5  -> one EUP op/elem
        s = 0.5 * jnp.tanh(half_k * x - half_ka) + 0.5
        o_ref[...] = (x + (b - x) * s).astype(o_ref.dtype)

    return kernel


def _softswitch_param_kernel(params_ref, x_ref, o_ref):
    """Kernel for traced (array) parameters: params = [b, k/2, k*a/2] in SMEM."""
    b = params_ref[0]
    half_k = params_ref[1]
    half_ka = params_ref[2]
    x = x_ref[...].astype(jnp.float32)
    s = 0.5 * jnp.tanh(half_k * x - half_ka) + 0.5
    o_ref[...] = (x + (b - x) * s).astype(o_ref.dtype)


def soft_switch_single(x, a=0.0, b=1.0, k=1.0):
    """SoftSwitchSingle forward: x + (b - x) * sigmoid(k * (x - a)), elementwise."""
    orig_shape = x.shape
    dtype = x.dtype
    total = int(math.prod(orig_shape)) if orig_shape else 1
    elem_bytes = jnp.dtype(dtype).itemsize

    # bf16 compute on generations with a bf16 VPU/EUP (v6e/v7x); f32 otherwise.
    is_v5 = "v5" in jax.devices()[0].device_kind.lower()
    compute_dtype = (
        jnp.bfloat16 if (dtype == jnp.bfloat16 and not is_v5) else jnp.float32
    )

    # --- lane-dense view + block/grid selection --------------------------------
    lane = None
    for cand in (2048, 1024, 512, 256, 128):
        if total % cand == 0:
            lane = cand
            break

    if lane is not None:
        # Common path: lane-dense 2-D slab [rows, lane].
        rows = total // lane
        x_view = x.reshape(rows, lane)
        row_tile = max(8, (TARGET_BLOCK_BYTES // (lane * elem_bytes)) // 8 * 8)
        if row_tile >= rows:
            row_tile = rows  # full sublane extent is always a legal block dim
        grid = (pl.cdiv(rows, row_tile),)
        block_shape = (row_tile, lane)
        index_map = lambda i: (i, 0)
        view_shape = (rows, lane)
    else:
        # Ragged element count: flat 1-D view, partial boundary block is masked
        # by Pallas -- no pad/slice round trips.
        x_view = x.reshape(total)
        tile = max(1024, (TARGET_BLOCK_BYTES // elem_bytes) // 1024 * 1024)
        if tile >= total:
            tile = total  # full-extent block is always legal
        grid = (pl.cdiv(total, tile),)
        block_shape = (tile,)
        index_map = lambda i: (i,)
        view_shape = (total,)

    data_spec = pl.BlockSpec(block_shape, index_map)
    out_spec = pl.BlockSpec(block_shape, index_map)

    cost = pl.CostEstimate(
        flops=7 * total,
        transcendentals=total,
        bytes_accessed=2 * total * elem_bytes,
    )
    compiler_params = pltpu.CompilerParams(
        # Shards the grid across v7x's 2 TCs / is harmless on 1-TC chips.
        dimension_semantics=("parallel",),
        vmem_limit_bytes=VMEM_LIMIT_BYTES,
    )

    static_params = all(isinstance(p, (int, float)) for p in (a, b, k))

    if static_params:
        # Bake constants into the kernel (no params array, no SMEM loads).
        kernel = _make_const_kernel(
            b=float(b),
            half_k=0.5 * float(k),
            half_ka=0.5 * float(k) * float(a),
            compute_dtype=compute_dtype,
        )
        out_view = pl.pallas_call(
            kernel,
            out_shape=jax.ShapeDtypeStruct(view_shape, dtype),
            grid=grid,
            in_specs=[data_spec],
            out_specs=out_spec,
            compiler_params=compiler_params,
            cost_estimate=cost,
        )(x_view)
    else:
        # Traced / trainable parameters: [b, k/2, k*a/2] as a (3,) f32 SMEM operand.
        af = jnp.asarray(a, dtype=jnp.float32)
        bf = jnp.asarray(b, dtype=jnp.float32)
        kf = jnp.asarray(k, dtype=jnp.float32)
        params = jnp.stack([bf, 0.5 * kf, 0.5 * kf * af])
        out_view = pl.pallas_call(
            _softswitch_param_kernel,
            out_shape=jax.ShapeDtypeStruct(view_shape, dtype),
            grid=grid,
            in_specs=[pl.BlockSpec(memory_space=pltpu.SMEM), data_spec],
            out_specs=out_spec,
            compiler_params=compiler_params,
            cost_estimate=cost,
        )(params, x_view)

    return out_view.reshape(orig_shape)


def soft_switch_single_ref(x, a=0.0, b=1.0, k=1.0):
    """Pure-JAX reference matching the PyTorch forward."""
    smooth_step = jax.nn.sigmoid(k * (x - a))
    return x + (b - x) * smooth_step


if __name__ == "__main__":
    key = jax.random.PRNGKey(0)
    # Small NCHW input consistent with typical conv-feature usage.
    x = jax.random.normal(key, (2, 4, 16, 16), dtype=jnp.float32)

    # Module defaults a=0, b=1, k=1 (Python scalars -> constant-folded kernel path).
    a, b, k = 0.0, 1.0, 1.0

    out = jax.block_until_ready(soft_switch_single(x, a, b, k))
    ref = soft_switch_single_ref(x, a, b, k)

    assert out.shape == x.shape
    assert out.dtype == x.dtype
    # tanh-form sigmoid differs from jax.nn.sigmoid only at the ~1e-7 level.
    assert jnp.allclose(out, ref, atol=1e-5, rtol=1e-5)

    # Also exercise the traced-parameter (SMEM) path once for coverage.
    a_t = jnp.asarray(0.25, jnp.float32)
    b_t = jnp.asarray(2.0, jnp.float32)
    k_t = jnp.asarray(3.0, jnp.float32)
    out_t = jax.block_until_ready(soft_switch_single(x, a_t, b_t, k_t))
    ref_t = soft_switch_single_ref(x, a_t, b_t, k_t)
    assert jnp.allclose(out_t, ref_t, atol=1e-5, rtol=1e-5)

    print("KERNEL_OK")
</pallas_src>

<mosaic_0001>
module attributes {stable_mosaic.version = 11 : i64} {
  func.func @kernel(%arg0: i32, %arg1: memref<1x2048xf32, #tpu.memory_space<vmem>>, %arg2: memref<1x2048xf32, #tpu.memory_space<vmem>>) attributes {dimension_semantics = [#tpu.dimension_semantics<parallel>], iteration_bounds = array<i64: 1>, scalar_prefetch = 0 : i64, scratch_operands = 0 : i64, tpu.core_type = #tpu.core_type<tc>, window_params = [{transform_indices = @transform_0, window_bounds = array<i64: 1, 2048>}, {transform_indices = @transform_1, window_bounds = array<i64: 1, 2048>}]} {
    %c0 = arith.constant 0 : index
    %c0_0 = arith.constant 0 : index
    %0 = vector.load %arg1[%c0, %c0_0] : memref<1x2048xf32, #tpu.memory_space<vmem>>, vector<1x2048xf32>
    %cst = arith.constant 5.000000e-01 : f32
    %1 = vector.broadcast %cst : f32 to vector<1x2048xf32>
    %2 = arith.mulf %1, %0 : vector<1x2048xf32>
    %cst_1 = arith.constant 0.000000e+00 : f32
    %3 = vector.broadcast %cst_1 : f32 to vector<1x2048xf32>
    %4 = arith.subf %2, %3 : vector<1x2048xf32>
    %5 = math.tanh %4 : vector<1x2048xf32>
    %cst_2 = arith.constant 5.000000e-01 : f32
    %6 = vector.broadcast %cst_2 : f32 to vector<1x2048xf32>
    %7 = arith.mulf %6, %5 : vector<1x2048xf32>
    %cst_3 = arith.constant 5.000000e-01 : f32
    %8 = vector.broadcast %cst_3 : f32 to vector<1x2048xf32>
    %9 = arith.addf %7, %8 : vector<1x2048xf32>
    %cst_4 = arith.constant 1.000000e+00 : f32
    %10 = vector.broadcast %cst_4 : f32 to vector<1x2048xf32>
    %11 = arith.subf %10, %0 : vector<1x2048xf32>
    %12 = arith.mulf %11, %9 : vector<1x2048xf32>
    %13 = arith.addf %0, %12 : vector<1x2048xf32>
    %c0_5 = arith.constant 0 : index
    %c0_6 = arith.constant 0 : index
    %14 = vector.load %arg2[%c0_5, %c0_6] : memref<1x2048xf32, #tpu.memory_space<vmem>>, vector<1x2048xf32>
    tpu.vector_store %arg2[%c0_5, %c0_6], %13 {strides = array<i32>} : memref<1x2048xf32, #tpu.memory_space<vmem>>, vector<1x2048xf32>,
    return
  }
  func.func @transform_0(%arg0: i32) -> (i32, i32) {
    %c0_i32 = arith.constant 0 : i32
    %c0_i32_0 = arith.constant 0 : i32
    return %arg0, %c0_i32 : i32, i32
  }
  func.func @transform_1(%arg0: i32) -> (i32, i32) {
    %c0_i32 = arith.constant 0 : i32
    %c0_i32_0 = arith.constant 0 : i32
    return %arg0, %c0_i32 : i32, i32
  }
}

</mosaic_0001>

<llo_original>
// kernel: tpu_custom_call.1
$region0: #{tpu_custom_call.1}
  #allocation0 [shape = 'u32[]', space=smem, size = 0x4, offset = 0x4, fixed_abs, tag = 'smem constant byte address 0x4 - core index']
  #allocation1 [shape = 'u32[144,128]{1,0:T(1,128)}', space=vmem, size = 0x12000, scoped, tag = 'internal scratch']
  %s0 = inlined_call_operand.hbm [shape: f32[1,2048], index: 0, kind: input, shape index: {}]
  %s1 = inlined_call_operand.hbm [shape: f32[1,2048], index: 1, kind: output, shape index: {}]
  %s2 = sld [smem:[#allocation0]]
  $region18: #{tpu_custom_call.1} parent=0
    _
  %s4 = ssub.s32 1, %s2
  %s5 = scalar_select 0, %s4, %s2
  $region1: #{tpu_custom_call.1} parent=0
    #allocation2 [shape = 'u8[8192]{0}', space=vmem, size = 0x2000, scoped, tag = 'input window, operand 0, single buffered']
    #allocation3 [shape = 's32[1]{0}', space=sflag, size = 0x4, scoped, tag = 'scoped memory for tpu_custom_call.1']
    #allocation4 [shape = 's32[1]{0}', space=sflag, size = 0x4, scoped, tag = 'scoped memory for tpu_custom_call.1']
    #allocation5 [shape = 'u8[8192]{0}', space=vmem, size = 0x2000, scoped, tag = 'output window, operand 0, single buffered']
    %6 = vsyncpa [#allocation3], 0
    %7 = vsyncpa [#allocation4], 0
    // Predicated region
    $region2: #{tpu_custom_call.1} parent=1 // pred_check
      _
    $region3: #{tpu_custom_call.1} parent=1 // pred_check_branch
      %9 = sbr.rel (0) target = $region5
    $region4: #{tpu_custom_call.1} parent=1 // pred_region
      %s11 = ssub.s32 256, 256
      %12 = vsyncadd [#allocation3], %s11
      %s14 = sshll.u32 [#allocation2], 4
      %s15 = int_to_ptr.vmem [resolvable:$true] %s14
      %17 = dma.hbm_to_vmem [thread:$0]  %s0, 256, %s15, [#allocation3]
    $region5: #{tpu_custom_call.1} parent=1 // pred_fallthru
      _
    // Predicated region
    $region6: #{tpu_custom_call.1} parent=1 // pred_check
      _
    $region7: #{tpu_custom_call.1} parent=1 // pred_check_branch
      %19 = sbr.rel (0) target = $region9
    $region8: #{tpu_custom_call.1} parent=1 // pred_region
      %20 = dma.done [#allocation3], 256
    $region9: #{tpu_custom_call.1} parent=1 // pred_fallthru
      _
    %v21 = vld [vmem:[#allocation2] sm:$0xff]
    %v22 = vld [vmem:[#allocation2 + $0x8] sm:$0xff]
    %v23 = vmul.f32 %v21, 0.5
    %v24 = vmul.f32 %v22, 0.5
    %v25 = vtanh.pop %v23
    %v26 = vtanh.pop %v24
    %v27 = vmul.f32 %v25, 0.5
    %v28 = vmul.f32 %v26, 0.5
    %v29 = vadd.f32 %v27, 0.5
    %v30 = vadd.f32 %v28, 0.5
    %v31 = vsub.f32 1.0, %v21
    %v32 = vsub.f32 1.0, %v22
    %v33 = vmul.f32 %v31, %v29
    %v34 = vmul.f32 %v32, %v30
    %v35 = vadd.f32 %v21, %v33
    %v36 = vadd.f32 %v22, %v34
    %37 = vst [vmem:[#allocation5] sm:$0xff] %v35
    %38 = vst [vmem:[#allocation5 + $0x8] sm:$0xff] %v36
    // Predicated region
    $region10: #{tpu_custom_call.1} parent=1 // pred_check
      _
    $region11: #{tpu_custom_call.1} parent=1 // pred_check_branch
      %40 = sbr.rel (0) target = $region13
    $region12: #{tpu_custom_call.1} parent=1 // pred_region
      %s42 = ssub.s32 256, 256
      %43 = vsyncadd [#allocation4], %s42
      %s45 = sshll.u32 [#allocation5], 4
      %s46 = int_to_ptr.vmem [resolvable:$true] %s45
      %48 = dma.vmem_to_hbm [thread:$0]  %s46, 256, %s1, [#allocation4]
    $region13: #{tpu_custom_call.1} parent=1 // pred_fallthru
      _
    // Predicated region
    $region14: #{tpu_custom_call.1} parent=1 // pred_check
      _
    $region15: #{tpu_custom_call.1} parent=1 // pred_check_branch
      %50 = sbr.rel (0) target = $region17
    $region16: #{tpu_custom_call.1} parent=1 // pred_region
      %51 = dma.done [#allocation4], 256
    $region17: #{tpu_custom_call.1} parent=1 // pred_fallthru
      _
    %52 = vsyncpa [#allocation3], 1
    %53 = vsyncpa [#allocation4], 1

</llo_original>
